<compile_context>
chip_gen: v7x
topology: tpu7x:2x2x1
jax: 0.10.0
libtpu: 0.0.40
codegen_flags: <defaults>
</compile_context>

<pallas_src>
import functools
import math

import jax
import jax.numpy as jnp
from jax.experimental import pallas as pl
from jax.experimental.pallas import tpu as pltpu


def _squashing_variance_kernel(
    x_ref,
    o_ref,
    mask_ref,
    acc_ref,
    *,
    num_params,
    num_rows,
    block_rows,
    blocks_per_slice,
    mask_rows,
):
    # x_ref block: (block_rows, row_width) lane-dense slab.
    s = pl.program_id(0)
    j = pl.program_id(1)

    @pl.when(j == 0)
    def _():
        # Build the channel-1 mask ONCE per slice (hoisted out of steady state)
        # and zero the (1,1) scalar accumulator.
        tf, w = mask_ref.shape
        lane = jax.lax.broadcasted_iota(jnp.int32, (tf, w), 1)
        mask_ref[...] = jnp.where((lane % num_params) == 1, 1.0, 0.0).astype(
            jnp.float32
        )
        acc_ref[...] = jnp.zeros_like(acc_ref)

    # Steady state: one VPU multiply + one block->scalar reduce (XLU) + add.
    masked = x_ref[...].astype(jnp.float32) * mask_ref[...]

    if mask_rows:
        # Unclamped global block index (index_map clamps; we must not).
        block_global = s * blocks_per_slice + j
        needs_row_mask = (block_global + 1) * block_rows > num_rows

        @pl.when(jnp.logical_not(needs_row_mask))
        def _():
            # Common fast path: full block, no row masking.
            acc_ref[...] += jnp.sum(masked).reshape(1, 1)

        @pl.when(needs_row_mask)
        def _():
            # Tail block (partial rows) or clamped padding block (all rows
            # out of range -> contributes exactly zero).
            tf, w = masked.shape
            row = (
                jax.lax.broadcasted_iota(jnp.int32, (tf, w), 0)
                + block_global * block_rows
            )
            acc_ref[...] += jnp.sum(
                jnp.where(row < num_rows, masked, 0.0)
            ).reshape(1, 1)
    else:
        acc_ref[...] += jnp.sum(masked).reshape(1, 1)

    @pl.when(j == pl.num_programs(1) - 1)
    def _():
        o_ref[...] = acc_ref[...]


def _choose_2d_view(x):
    """Pick a lane-dense, copy-free 2-D view whose rows are multiples of P."""
    num_features, granularity, num_params = x.shape
    total = num_features * granularity * num_params
    width = granularity * num_params
    if width % 128 == 0:
        # Natural view is already lane-dense.
        return x.reshape(num_features, width), num_features, width
    # Re-tile to rows of lcm(128, P): full lane occupancy, long DMA rows, and
    # (lane % P == 1) still selects channel 1 since the row length is a
    # multiple of P.  Pure reshape of a contiguous array => free.
    w2 = 128 * num_params // math.gcd(128, num_params)
    if total % w2 == 0 and total // w2 >= 8:
        return x.reshape(total // w2, w2), total // w2, w2
    # Fallback: correct but lane-padded (last dim == full array dim is legal).
    return x.reshape(num_features, width), num_features, width


def squashing_variance_loss(
    x,
    *,
    block_bytes=4 * 1024 * 1024,
    num_slices=2,
    min_pallas_elements=8192,
):
    """x: (num_features, granularity, num_params) float array -> scalar loss."""
    num_features, granularity, num_params = x.shape
    if num_params < 2:
        # The reference module indexes channel 1; P < 2 is ill-defined there.
        raise ValueError("SquashingVarianceLoss requires num_params >= 2.")
    factor = num_features * granularity * num_params

    # Kernel launch overhead dwarfs HBM traffic for tiny inputs.
    if factor < min_pallas_elements:
        return squashing_variance_loss_ref(x)

    x2d, num_rows, row_width = _choose_2d_view(x)

    # Rows per block: ~block_bytes per input block, rounded to the dtype's
    # sublane packing (8 rows f32, 16 bf16, 32 int8/fp8).
    itemsize = x.dtype.itemsize
    sublane_pack = 8 * max(1, 4 // itemsize)
    bytes_per_row = row_width * itemsize
    max_rows = max(sublane_pack, block_bytes // bytes_per_row)
    if num_rows <= max_rows:
        block_rows = num_rows  # full dim: no divisibility constraint
    else:
        block_rows = max(sublane_pack, (max_rows // sublane_pack) * sublane_pack)

    num_blocks = pl.cdiv(num_rows, block_rows)
    ns = max(1, min(num_slices, num_blocks))  # leading parallel axis (2 TCs on v7x)
    bps = pl.cdiv(num_blocks, ns)             # blocks per slice
    # Row masking needed iff a partial tail block or padding blocks exist.
    mask_rows = block_rows * bps * ns != num_rows

    kernel = functools.partial(
        _squashing_variance_kernel,
        num_params=num_params,
        num_rows=num_rows,
        block_rows=block_rows,
        blocks_per_slice=bps,
        mask_rows=mask_rows,
    )

    def in_index_map(s, j):
        # Clamp so padding grid steps re-read a valid block (fully masked).
        return (jnp.minimum(s * bps + j, num_blocks - 1), 0)

    # Explicit VMEM budget: 2x double-buffered input block + f32 mask scratch
    # + headroom; keep within 64 MiB (v7x physical), at least 32 MiB elsewhere.
    in_block_bytes = block_rows * row_width * itemsize
    mask_bytes = block_rows * row_width * 4
    vmem_limit = min(
        64 * 1024 * 1024,
        max(32 * 1024 * 1024, 2 * in_block_bytes + mask_bytes + 8 * 1024 * 1024),
    )

    partials = pl.pallas_call(
        kernel,
        out_shape=jax.ShapeDtypeStruct((ns, 1), jnp.float32),
        grid_spec=pltpu.PrefetchScalarGridSpec(
            num_scalar_prefetch=0,
            grid=(ns, bps),
            in_specs=[pl.BlockSpec((block_rows, row_width), in_index_map)],
            out_specs=pl.BlockSpec((1, 1), lambda s, j: (s, 0)),
            scratch_shapes=[
                pltpu.VMEM((block_rows, row_width), jnp.float32),  # channel-1 mask
                pltpu.VMEM((1, 1), jnp.float32),                   # scalar partial
            ],
        ),
        compiler_params=pltpu.CompilerParams(
            dimension_semantics=("parallel", "arbitrary"),
            vmem_limit_bytes=vmem_limit,
        ),
        cost_estimate=pl.CostEstimate(
            flops=2 * factor,
            transcendentals=0,
            bytes_accessed=x.size * itemsize + ns * 4,
        ),
    )(x2d)

    return (jnp.sum(partials) / jnp.float32(factor)).astype(x.dtype)


def squashing_variance_loss_ref(x):
    # Pure-JAX reference matching the PyTorch forward exactly.
    num_features, granularity, num_params = x.shape
    var = x.reshape(num_features * granularity, num_params)[..., 1].reshape(
        num_features, granularity
    )
    factor = num_features * granularity * num_params
    return (var.astype(jnp.float32).sum() / jnp.float32(factor)).astype(x.dtype)


if __name__ == "__main__":
    key = jax.random.PRNGKey(0)
    key_a, key_b, key_c = jax.random.split(key, 3)

    # Shapes consistent with the module: (num_features, granularity, num_params)
    F, G, P = 300, 16, 8  # width = 128 -> natural lane-dense layout
    x = jax.random.normal(key_a, (F, G, P), dtype=jnp.float32)
    ref = squashing_variance_loss_ref(x)

    # Default path: single large block per slice.
    out = jax.block_until_ready(squashing_variance_loss(x))
    assert jnp.allclose(out, ref, atol=1e-6, rtol=1e-5), (out, ref)

    # Small-block path: multi-block grid, 2-slice split, padding + tail masking.
    out2 = jax.block_until_ready(squashing_variance_loss(x, block_bytes=64 * 1024))
    assert jnp.allclose(out2, ref, atol=1e-6, rtol=1e-5), (out2, ref)

    # Non-128-multiple lane width where re-tiling is impossible (fallback view).
    F2, G2, P2 = 257, 10, 8  # width = 80, total not divisible by 128
    x2 = jax.random.normal(key_b, (F2, G2, P2), dtype=jnp.float32)
    ref2 = squashing_variance_loss_ref(x2)
    out3 = jax.block_until_ready(squashing_variance_loss(x2, block_bytes=64 * 1024))
    assert jnp.allclose(out3, ref2, atol=1e-6, rtol=1e-5), (out3, ref2)

    # Non-128-multiple width where lane-dense re-tiling kicks in (rows of 128).
    F3, G3, P3 = 128, 10, 8  # width = 80, total = 10240 divisible by 128
    x3 = jax.random.normal(key_c, (F3, G3, P3), dtype=jnp.float32)
    ref3 = squashing_variance_loss_ref(x3)
    out4 = jax.block_until_ready(squashing_variance_loss(x3, block_bytes=16 * 1024))
    assert jnp.allclose(out4, ref3, atol=1e-6, rtol=1e-5), (out4, ref3)

    # bf16 input: exercises 16-row sublane packing; result comes back as bf16.
    xb = x.astype(jnp.bfloat16)
    refb = squashing_variance_loss_ref(xb)
    outb = jax.block_until_ready(squashing_variance_loss(xb, block_bytes=64 * 1024))
    assert outb.dtype == jnp.bfloat16
    assert jnp.allclose(
        outb.astype(jnp.float32), refb.astype(jnp.float32), atol=1e-3, rtol=1e-2
    ), (outb, refb)

    # Tiny input: pure-JAX fallback path.
    xt = jax.random.normal(key_a, (4, 4, 4), dtype=jnp.float32)
    outt = jax.block_until_ready(squashing_variance_loss(xt))
    assert jnp.allclose(outt, squashing_variance_loss_ref(xt), atol=1e-6)

    print("KERNEL_OK")
</pallas_src>

<mosaic_0001>
module attributes {stable_mosaic.version = 11 : i64} {
  func.func @_squashing_variance_kernel(%arg0: i32, %arg1: i32, %arg2: memref<300x128xf32, #tpu.memory_space<vmem>>, %arg3: memref<1x1xf32, #tpu.memory_space<vmem>>, %arg4: memref<300x128xf32, #tpu.memory_space<vmem>>, %arg5: memref<1x1xf32, #tpu.memory_space<vmem>>) attributes {dimension_semantics = [#tpu.dimension_semantics<parallel>, #tpu.dimension_semantics<arbitrary>], iteration_bounds = array<i64: 1, 1>, scalar_prefetch = 0 : i64, scratch_operands = 2 : i64, tpu.core_type = #tpu.core_type<tc>, window_params = [{transform_indices = @transform_0, window_bounds = array<i64: 300, 128>}, {transform_indices = @transform_1, window_bounds = array<i64: 1, 1>}]} {
    %c0_i32 = arith.constant 0 : i32
    %0 = arith.cmpi eq, %arg1, %c0_i32 : i32
    %1 = arith.extui %0 : i1 to i32
    %c0_i32_0 = arith.constant 0 : i32
    %2 = arith.cmpi ne, %1, %c0_i32_0 : i32
    scf.if %2 {
      %17 = tpu.iota {dimensions = array<i32: 1>} : vector<300x128xi32>
      %c8_i32 = arith.constant 8 : i32
      %c0_i32_10 = arith.constant 0 : i32
      %18 = arith.cmpi eq, %c8_i32, %c0_i32_10 : i32
      %c1_i32 = arith.constant 1 : i32
      %19 = arith.select %18, %c1_i32, %c8_i32 : i32
      %20 = vector.broadcast %19 : i32 to vector<300x128xi32>
      %21 = arith.remsi %17, %20 : vector<300x128xi32>
      %c0_i32_11 = arith.constant 0 : i32
      %22 = vector.broadcast %c0_i32_11 : i32 to vector<300x128xi32>
      %23 = arith.cmpi ne, %21, %22 : vector<300x128xi32>
      %c0_i32_12 = arith.constant 0 : i32
      %24 = vector.broadcast %c0_i32_12 : i32 to vector<300x128xi32>
      %25 = arith.cmpi slt, %21, %24 : vector<300x128xi32>
      %c0_i32_13 = arith.constant 0 : i32
      %26 = arith.cmpi slt, %19, %c0_i32_13 : i32
      %27 = vector.broadcast %26 : i1 to vector<300x128xi1>
      %28 = vector.broadcast %27 : vector<300x128xi1> to vector<300x128xi1>
      %29 = arith.xori %25, %28 : vector<300x128xi1>
      %30 = arith.andi %29, %23 : vector<300x128xi1>
      %31 = vector.broadcast %19 : i32 to vector<300x128xi32>
      %32 = arith.addi %21, %31 : vector<300x128xi32>
      %33 = arith.select %30, %32, %21 : vector<300x128xi1>, vector<300x128xi32>
      %c1_i32_14 = arith.constant 1 : i32
      %34 = vector.broadcast %c1_i32_14 : i32 to vector<300x128xi32>
      %35 = arith.cmpi eq, %33, %34 : vector<300x128xi32>
      %cst_15 = arith.constant 1.000000e+00 : f32
      %cst_16 = arith.constant 0.000000e+00 : f32
      %36 = vector.broadcast %cst_15 : f32 to vector<300x128xf32>
      %37 = vector.broadcast %cst_16 : f32 to vector<300x128xf32>
      %38 = arith.select %35, %36, %37 : vector<300x128xi1>, vector<300x128xf32>
      %c0_17 = arith.constant 0 : index
      %c0_18 = arith.constant 0 : index
      %39 = vector.load %arg4[%c0_17, %c0_18] : memref<300x128xf32, #tpu.memory_space<vmem>>, vector<300x128xf32>
      tpu.vector_store %arg4[%c0_17, %c0_18], %38 {strides = array<i32>} : memref<300x128xf32, #tpu.memory_space<vmem>>, vector<300x128xf32>,
      %cst_19 = arith.constant 0.000000e+00 : f32
      %40 = vector.broadcast %cst_19 : f32 to vector<1x1xf32>
      %c0_20 = arith.constant 0 : index
      %c0_21 = arith.constant 0 : index
      %41 = vector.load %arg5[%c0_20, %c0_21] : memref<1x1xf32, #tpu.memory_space<vmem>>, vector<1x1xf32>
      tpu.vector_store %arg5[%c0_20, %c0_21], %40 {strides = array<i32>} : memref<1x1xf32, #tpu.memory_space<vmem>>, vector<1x1xf32>,
    } else {
    }
    %c0 = arith.constant 0 : index
    %c0_1 = arith.constant 0 : index
    %3 = vector.load %arg2[%c0, %c0_1] : memref<300x128xf32, #tpu.memory_space<vmem>>, vector<300x128xf32>
    %c0_2 = arith.constant 0 : index
    %c0_3 = arith.constant 0 : index
    %4 = vector.load %arg4[%c0_2, %c0_3] : memref<300x128xf32, #tpu.memory_space<vmem>>, vector<300x128xf32>
    %5 = arith.mulf %3, %4 : vector<300x128xf32>
    %c0_4 = arith.constant 0 : index
    %c0_5 = arith.constant 0 : index
    %6 = vector.load %arg5[%c0_4, %c0_5] : memref<1x1xf32, #tpu.memory_space<vmem>>, vector<1x1xf32>
    %7 = vector.shape_cast %5 : vector<300x128xf32> to vector<1x300x128xf32>
    %cst = arith.constant dense<0.000000e+00> : vector<1xf32>
    %8 = vector.multi_reduction <add>, %7, %cst [1, 2] : vector<1x300x128xf32> to vector<1xf32>
    %9 = vector.shape_cast %8 : vector<1xf32> to vector<1x1x1xf32>
    %10 = vector.extract %9[0, 0, 0] : f32 from vector<1x1x1xf32>
    %11 = vector.broadcast %10 : f32 to vector<1x1xf32>
    %12 = arith.addf %6, %11 : vector<1x1xf32>
    %c0_6 = arith.constant 0 : index
    %c0_7 = arith.constant 0 : index
    %13 = vector.load %arg5[%c0_6, %c0_7] : memref<1x1xf32, #tpu.memory_space<vmem>>, vector<1x1xf32>
    tpu.vector_store %arg5[%c0_6, %c0_7], %12 {strides = array<i32>} : memref<1x1xf32, #tpu.memory_space<vmem>>, vector<1x1xf32>,
    %c0_i32_8 = arith.constant 0 : i32
    %14 = arith.cmpi eq, %arg1, %c0_i32_8 : i32
    %15 = arith.extui %14 : i1 to i32
    %c0_i32_9 = arith.constant 0 : i32
    %16 = arith.cmpi ne, %15, %c0_i32_9 : i32
    scf.if %16 {
      %c0_10 = arith.constant 0 : index
      %c0_11 = arith.constant 0 : index
      %17 = vector.load %arg5[%c0_10, %c0_11] : memref<1x1xf32, #tpu.memory_space<vmem>>, vector<1x1xf32>
      %c0_12 = arith.constant 0 : index
      %c0_13 = arith.constant 0 : index
      %18 = vector.load %arg3[%c0_12, %c0_13] : memref<1x1xf32, #tpu.memory_space<vmem>>, vector<1x1xf32>
      tpu.vector_store %arg3[%c0_12, %c0_13], %17 {strides = array<i32>} : memref<1x1xf32, #tpu.memory_space<vmem>>, vector<1x1xf32>,
    } else {
    }
    return
  }
  func.func @transform_0(%arg0: i32, %arg1: i32) -> (i32, i32) {
    %c1_i32 = arith.constant 1 : i32
    %0 = arith.muli %arg0, %c1_i32 : i32
    %1 = arith.addi %0, %arg1 : i32
    %c0_i32 = arith.constant 0 : i32
    %2 = arith.minsi %1, %c0_i32 : i32
    %c0_i32_0 = arith.constant 0 : i32
    %c0_i32_1 = arith.constant 0 : i32
    return %2, %c0_i32_0 : i32, i32
  }
  func.func @transform_1(%arg0: i32, %arg1: i32) -> (i32, i32) {
    %c0_i32 = arith.constant 0 : i32
    %c0_i32_0 = arith.constant 0 : i32
    return %arg0, %c0_i32 : i32, i32
  }
}

</mosaic_0001>

<llo_original>
// kernel: tpu_custom_call.1
$region0: #{tpu_custom_call.1}
  #allocation0 [shape = 'u32[]', space=smem, size = 0x4, offset = 0x4, fixed_abs, tag = 'smem constant byte address 0x4 - core index']
  #allocation1 [shape = 'u32[144,128]{1,0:T(1,128)}', space=vmem, size = 0x12000, scoped, tag = 'internal scratch']
  #allocation2 [shape = 'f32[300,128]{1,0:T(8,128)}', space=vmem, size = 0x26000, scoped, tag = 'scratch operand']
  #allocation3 [shape = 'f32[1,1]{1,0:T(1,128)}', space=vmem, size = 0x200, scoped, tag = 'scratch operand']
  %s0 = inlined_call_operand.hbm [shape: f32[300,128], index: 0, kind: input, shape index: {}]
  %s1 = inlined_call_operand.hbm [shape: f32[1,1], index: 1, kind: output, shape index: {}]
  %s2 = sld [smem:[#allocation0]]
  $region26: #{tpu_custom_call.1} parent=0
    _
  %s4 = ssub.s32 1, %s2
  %s5 = scalar_select 0, %s4, %s2
  $region1: #{tpu_custom_call.1} parent=0
    #allocation4 [shape = 'u8[155648]{0}', space=vmem, size = 0x26000, scoped, tag = 'input window, operand 0, single buffered']
    #allocation5 [shape = 's32[1]{0}', space=sflag, size = 0x4, scoped, tag = 'scoped memory for tpu_custom_call.1']
    #allocation6 [shape = 's32[1]{0}', space=sflag, size = 0x4, scoped, tag = 'scoped memory for tpu_custom_call.1']
    #allocation7 [shape = 'u8[512]{0}', space=vmem, size = 0x400, scoped, tag = 'output window, operand 0, single buffered']
    %6 = vsyncpa [#allocation5], 0
    %7 = vsyncpa [#allocation6], 0
    // Predicated region
    $region2: #{tpu_custom_call.1} parent=1 // pred_check
      _
    $region3: #{tpu_custom_call.1} parent=1 // pred_check_branch
      %9 = sbr.rel (0) target = $region5
    $region4: #{tpu_custom_call.1} parent=1 // pred_region
      %s10 = sadd.s32 0, 0
      %p11 = scmp.lt.s32.totalorder %s10, 0
      %s12 = scalar_select %p11, %s10, 0
      %s13 = smul.u32 38, %s12
      %s15 = ssub.s32 4864, 4864
      %16 = vsyncadd [#allocation5], %s15
      %s17 = smul.addr %s13, 128
      %s18 = scalar_lea.hbm %s0, %s17
      %s19 = sshll.u32 [#allocation4], 4
      %s20 = int_to_ptr.vmem [resolvable:$true] %s19
      %25 = dma.hbm_to_vmem [thread:$0]  %s18, 4864, %s20, [#allocation5], 128, 128, 8
    $region5: #{tpu_custom_call.1} parent=1 // pred_fallthru
      _
    // Predicated region
    $region6: #{tpu_custom_call.1} parent=1 // pred_check
      _
    $region7: #{tpu_custom_call.1} parent=1 // pred_check_branch
      %27 = sbr.rel (0) target = $region9
    $region8: #{tpu_custom_call.1} parent=1 // pred_region
      %28 = dma.done [#allocation5], 4864
    $region9: #{tpu_custom_call.1} parent=1 // pred_fallthru
      _
    %s29 = sadd.s32 0, 0
    %p30 = scmp.lt.s32.totalorder %s29, 0
    %s31 = scalar_select %p30, %s29, 0
    %s32 = smul.u32 38, %s31
    %p33 = scmp.eq.s32.totalorder 0, 0
    // Predicated region
    $region10: #{tpu_custom_call.1} parent=1 // pred_check
      %p34 = pneg %p33
    $region11: #{tpu_custom_call.1} parent=1 // pred_check_branch
      %36 = sbr.rel (%p34) target = $region13
    $region12: #{tpu_custom_call.1} parent=1 // pred_region
      %v37 = vlaneseq
      %v38 = vand.u32 %v37, 127
      %vm39 = vcmp.lt.s32.totalorder %v38, 0
      %v40 = vsub.s32 0, %v38
      %v41 = vsel %vm39, %v40, %v38
      %v42 = vshrl.u32 %v41, 3
      %v43 = vand.u32 %v41, 7
      %v44 = vsub.s32 0, %v43
      %v45 = vsel %vm39, %v44, %v43
      %vm46 = vcmp.ne.s32.totalorder %v45, 0
      %vm47 = vcmp.lt.s32.totalorder %v45, 0
      %vm48 = vmand %vm47, %vm46
      %v49 = vadd.s32 %v45, 8
      %v50 = vsel %vm48, %v49, %v45
      %vm51 = vcmp.eq.s32.totalorder %v50, 1
      %v52 = vsel %vm51, 1.0, 0.0
      %53 = vst [vmem:[#allocation2] sm:$0xff] %v52
      %54 = vst [vmem:[#allocation2 + $0x8] sm:$0xff] %v52
      %55 = vst [vmem:[#allocation2 + $0x10] sm:$0xff] %v52
      %56 = vst [vmem:[#allocation2 + $0x18] sm:$0xff] %v52
      %57 = vst [vmem:[#allocation2 + $0x20] sm:$0xff] %v52
      %58 = vst [vmem:[#allocation2 + $0x28] sm:$0xff] %v52
      %59 = vst [vmem:[#allocation2 + $0x30] sm:$0xff] %v52
      %60 = vst [vmem:[#allocation2 + $0x38] sm:$0xff] %v52
      %61 = vst [vmem:[#allocation2 + $0x40] sm:$0xff] %v52
      %62 = vst [vmem:[#allocation2 + $0x48] sm:$0xff] %v52
      %63 = vst [vmem:[#allocation2 + $0x50] sm:$0xff] %v52
      %64 = vst [vmem:[#allocation2 + $0x58] sm:$0xff] %v52
      %65 = vst [vmem:[#allocation2 + $0x60] sm:$0xff] %v52
      %66 = vst [vmem:[#allocation2 + $0x68] sm:$0xff] %v52
      %67 = vst [vmem:[#allocation2 + $0x70] sm:$0xff] %v52
      %68 = vst [vmem:[#allocation2 + $0x78] sm:$0xff] %v52
      %69 = vst [vmem:[#allocation2 + $0x80] sm:$0xff] %v52
      %70 = vst [vmem:[#allocation2 + $0x88] sm:$0xff] %v52
      %71 = vst [vmem:[#allocation2 + $0x90] sm:$0xff] %v52
      %72 = vst [vmem:[#allocation2 + $0x98] sm:$0xff] %v52
      %73 = vst [vmem:[#allocation2 + $0xa0] sm:$0xff] %v52
      %74 = vst [vmem:[#allocation2 + $0xa8] sm:$0xff] %v52
      %75 = vst [vmem:[#allocation2 + $0xb0] sm:$0xff] %v52
      %76 = vst [vmem:[#allocation2 + $0xb8] sm:$0xff] %v52
      %77 = vst [vmem:[#allocation2 + $0xc0] sm:$0xff] %v52
      %78 = vst [vmem:[#allocation2 + $0xc8] sm:$0xff] %v52
      %79 = vst [vmem:[#allocation2 + $0xd0] sm:$0xff] %v52
      %80 = vst [vmem:[#allocation2 + $0xd8] sm:$0xff] %v52
      %81 = vst [vmem:[#allocation2 + $0xe0] sm:$0xff] %v52
      %82 = vst [vmem:[#allocation2 + $0xe8] sm:$0xff] %v52
      %83 = vst [vmem:[#allocation2 + $0xf0] sm:$0xff] %v52
      %84 = vst [vmem:[#allocation2 + $0xf8] sm:$0xff] %v52
      %85 = vst [vmem:[#allocation2 + $0x100] sm:$0xff] %v52
      %86 = vst [vmem:[#allocation2 + $0x108] sm:$0xff] %v52
      %87 = vst [vmem:[#allocation2 + $0x110] sm:$0xff] %v52
      %88 = vst [vmem:[#allocation2 + $0x118] sm:$0xff] %v52
      %89 = vst [vmem:[#allocation2 + $0x120] sm:$0xff] %v52
      %90 = vst [vmem:[#allocation2 + $0x128] sm:$0xf] %v52
      %vm91 = vcmask 0
      %92 = vst.msk [vmem:[#allocation3] sm:$0x1] %vm91, 0.0
    $region13: #{tpu_custom_call.1} parent=1 // pred_fallthru
      _
    %v93 = vld [vmem:[#allocation4] sm:$0xff]
    %v94 = vld [vmem:[#allocation4 + $0x8] sm:$0xff]
    %v95 = vld [vmem:[#allocation4 + $0x10] sm:$0xff]
    %v96 = vld [vmem:[#allocation4 + $0x18] sm:$0xff]
    %v97 = vld [vmem:[#allocation4 + $0x20] sm:$0xff]
    %v98 = vld [vmem:[#allocation4 + $0x28] sm:$0xff]
    %v99 = vld [vmem:[#allocation4 + $0x30] sm:$0xff]
    %v100 = vld [vmem:[#allocation4 + $0x38] sm:$0xff]
    %v101 = vld [vmem:[#allocation4 + $0x40] sm:$0xff]
    %v102 = vld [vmem:[#allocation4 + $0x48] sm:$0xff]
    %v103 = vld [vmem:[#allocation4 + $0x50] sm:$0xff]
    %v104 = vld [vmem:[#allocation4 + $0x58] sm:$0xff]
    %v105 = vld [vmem:[#allocation4 + $0x60] sm:$0xff]
    %v106 = vld [vmem:[#allocation4 + $0x68] sm:$0xff]
    %v107 = vld [vmem:[#allocation4 + $0x70] sm:$0xff]
    %v108 = vld [vmem:[#allocation4 + $0x78] sm:$0xff]
    %v109 = vld [vmem:[#allocation4 + $0x80] sm:$0xff]
    %v110 = vld [vmem:[#allocation4 + $0x88] sm:$0xff]
    %v111 = vld [vmem:[#allocation4 + $0x90] sm:$0xff]
    %v112 = vld [vmem:[#allocation4 + $0x98] sm:$0xff]
    %v113 = vld [vmem:[#allocation4 + $0xa0] sm:$0xff]
    %v114 = vld [vmem:[#allocation4 + $0xa8] sm:$0xff]
    %v115 = vld [vmem:[#allocation4 + $0xb0] sm:$0xff]
    %v116 = vld [vmem:[#allocation4 + $0xb8] sm:$0xff]
    %v117 = vld [vmem:[#allocation4 + $0xc0] sm:$0xff]
    %v118 = vld [vmem:[#allocation4 + $0xc8] sm:$0xff]
    %v119 = vld [vmem:[#allocation4 + $0xd0] sm:$0xff]
    %v120 = vld [vmem:[#allocation4 + $0xd8] sm:$0xff]
    %v121 = vld [vmem:[#allocation4 + $0xe0] sm:$0xff]
    %v122 = vld [vmem:[#allocation4 + $0xe8] sm:$0xff]
    %v123 = vld [vmem:[#allocation4 + $0xf0] sm:$0xff]
    %v124 = vld [vmem:[#allocation4 + $0xf8] sm:$0xff]
    %v125 = vld [vmem:[#allocation4 + $0x100] sm:$0xff]
    %v126 = vld [vmem:[#allocation4 + $0x108] sm:$0xff]
    %v127 = vld [vmem:[#allocation4 + $0x110] sm:$0xff]
    %v128 = vld [vmem:[#allocation4 + $0x118] sm:$0xff]
    %v129 = vld [vmem:[#allocation4 + $0x120] sm:$0xff]
    %v130 = vld [vmem:[#allocation4 + $0x128] sm:$0xf]
    %v131 = vld [vmem:[#allocation2] sm:$0xff]
    %v132 = vld [vmem:[#allocation2 + $0x8] sm:$0xff]
    %v133 = vld [vmem:[#allocation2 + $0x10] sm:$0xff]
    %v134 = vld [vmem:[#allocation2 + $0x18] sm:$0xff]
    %v135 = vld [vmem:[#allocation2 + $0x20] sm:$0xff]
    %v136 = vld [vmem:[#allocation2 + $0x28] sm:$0xff]
    %v137 = vld [vmem:[#allocation2 + $0x30] sm:$0xff]
    %v138 = vld [vmem:[#allocation2 + $0x38] sm:$0xff]
    %v139 = vld [vmem:[#allocation2 + $0x40] sm:$0xff]
    %v140 = vld [vmem:[#allocation2 + $0x48] sm:$0xff]
    %v141 = vld [vmem:[#allocation2 + $0x50] sm:$0xff]
    %v142 = vld [vmem:[#allocation2 + $0x58] sm:$0xff]
    %v143 = vld [vmem:[#allocation2 + $0x60] sm:$0xff]
    %v144 = vld [vmem:[#allocation2 + $0x68] sm:$0xff]
    %v145 = vld [vmem:[#allocation2 + $0x70] sm:$0xff]
    %v146 = vld [vmem:[#allocation2 + $0x78] sm:$0xff]
    %v147 = vld [vmem:[#allocation2 + $0x80] sm:$0xff]
    %v148 = vld [vmem:[#allocation2 + $0x88] sm:$0xff]
    %v149 = vld [vmem:[#allocation2 + $0x90] sm:$0xff]
    %v150 = vld [vmem:[#allocation2 + $0x98] sm:$0xff]
    %v151 = vld [vmem:[#allocation2 + $0xa0] sm:$0xff]
    %v152 = vld [vmem:[#allocation2 + $0xa8] sm:$0xff]
    %v153 = vld [vmem:[#allocation2 + $0xb0] sm:$0xff]
    %v154 = vld [vmem:[#allocation2 + $0xb8] sm:$0xff]
    %v155 = vld [vmem:[#allocation2 + $0xc0] sm:$0xff]
    %v156 = vld [vmem:[#allocation2 + $0xc8] sm:$0xff]
    %v157 = vld [vmem:[#allocation2 + $0xd0] sm:$0xff]
    %v158 = vld [vmem:[#allocation2 + $0xd8] sm:$0xff]
    %v159 = vld [vmem:[#allocation2 + $0xe0] sm:$0xff]
    %v160 = vld [vmem:[#allocation2 + $0xe8] sm:$0xff]
    %v161 = vld [vmem:[#allocation2 + $0xf0] sm:$0xff]
    %v162 = vld [vmem:[#allocation2 + $0xf8] sm:$0xff]
    %v163 = vld [vmem:[#allocation2 + $0x100] sm:$0xff]
    %v164 = vld [vmem:[#allocation2 + $0x108] sm:$0xff]
    %v165 = vld [vmem:[#allocation2 + $0x110] sm:$0xff]
    %v166 = vld [vmem:[#allocation2 + $0x118] sm:$0xff]
    %v167 = vld [vmem:[#allocation2 + $0x120] sm:$0xff]
    %v168 = vld [vmem:[#allocation2 + $0x128] sm:$0xf]
    %v169 = vmul.f32 %v93, %v131
    %v170 = vmul.f32 %v94, %v132
    %v171 = vmul.f32 %v95, %v133
    %v172 = vmul.f32 %v96, %v134
    %v173 = vmul.f32 %v97, %v135
    %v174 = vmul.f32 %v98, %v136
    %v175 = vmul.f32 %v99, %v137
    %v176 = vmul.f32 %v100, %v138
    %v177 = vmul.f32 %v101, %v139
    %v178 = vmul.f32 %v102, %v140
    %v179 = vmul.f32 %v103, %v141
    %v180 = vmul.f32 %v104, %v142
    %v181 = vmul.f32 %v105, %v143
    %v182 = vmul.f32 %v106, %v144
    %v183 = vmul.f32 %v107, %v145
    %v184 = vmul.f32 %v108, %v146
    %v185 = vmul.f32 %v109, %v147
    %v186 = vmul.f32 %v110, %v148
    %v187 = vmul.f32 %v111, %v149
    %v188 = vmul.f32 %v112, %v150
    %v189 = vmul.f32 %v113, %v151
    %v190 = vmul.f32 %v114, %v152
    %v191 = vmul.f32 %v115, %v153
    %v192 = vmul.f32 %v116, %v154
    %v193 = vmul.f32 %v117, %v155
    %v194 = vmul.f32 %v118, %v156
    %v195 = vmul.f32 %v119, %v157
    %v196 = vmul.f32 %v120, %v158
    %v197 = vmul.f32 %v121, %v159
    %v198 = vmul.f32 %v122, %v160
    %v199 = vmul.f32 %v123, %v161
    %v200 = vmul.f32 %v124, %v162
    %v201 = vmul.f32 %v125, %v163
    %v202 = vmul.f32 %v126, %v164
    %v203 = vmul.f32 %v127, %v165
    %v204 = vmul.f32 %v128, %v166
    %v205 = vmul.f32 %v129, %v167
    %v206 = vmul.f32 %v130, %v168
    %v207 = vld [vmem:[#allocation3] sm:$0x1]
    %v208 = vadd.f32 %v169, %v170
    %v209 = vadd.f32 %v208, %v171
    %v210 = vadd.f32 %v209, %v172
    %v211 = vadd.f32 %v210, %v173
    %v212 = vadd.f32 %v211, %v174
    %v213 = vadd.f32 %v212, %v175
    %v214 = vadd.f32 %v213, %v176
    %v215 = vadd.f32 %v214, %v177
    %v216 = vadd.f32 %v215, %v178
    %v217 = vadd.f32 %v216, %v179
    %v218 = vadd.f32 %v217, %v180
    %v219 = vadd.f32 %v218, %v181
    %v220 = vadd.f32 %v219, %v182
    %v221 = vadd.f32 %v220, %v183
    %v222 = vadd.f32 %v221, %v184
    %v223 = vadd.f32 %v222, %v185
    %v224 = vadd.f32 %v223, %v186
    %v225 = vadd.f32 %v224, %v187
    %v226 = vadd.f32 %v225, %v188
    %v227 = vadd.f32 %v226, %v189
    %v228 = vadd.f32 %v227, %v190
    %v229 = vadd.f32 %v228, %v191
    %v230 = vadd.f32 %v229, %v192
    %v231 = vadd.f32 %v230, %v193
    %v232 = vadd.f32 %v231, %v194
    %v233 = vadd.f32 %v232, %v195
    %v234 = vadd.f32 %v233, %v196
    %v235 = vadd.f32 %v234, %v197
    %v236 = vadd.f32 %v235, %v198
    %v237 = vadd.f32 %v236, %v199
    %v238 = vadd.f32 %v237, %v200
    %v239 = vadd.f32 %v238, %v201
    %v240 = vadd.f32 %v239, %v202
    %v241 = vadd.f32 %v240, %v203
    %v242 = vadd.f32 %v241, %v204
    %v243 = vadd.f32 %v242, %v205
    %vm244 = vcmask 1043456
    %v245 = vsel %vm244, %v206, 0.0
    %v246 = vadd.f32 %v243, %v245
    %247 = vadd.xlane.f32.xlu0 %v246
    %v248 = vpop.xlane.xlu0 %247
    %v249 = vrot.slane %v248, 4
    %v250 = vadd.f32 %v248, %v249
    %v251 = vrot.slane %v250, 2
    %v252 = vadd.f32 %v250, %v251
    %v253 = vrot.slane %v252, 1
    %v254 = vadd.f32 %v252, %v253
    %s255 = vtos %v254
    %v256 = vstv %s255
    %v257 = vadd.f32 %v207, %v256
    %vm258 = vcmask 0
    %259 = vst.msk [vmem:[#allocation3] sm:$0x1] %vm258, %v257
    // Predicated region
    $region14: #{tpu_custom_call.1} parent=1 // pred_check
      %p260 = pneg %p33
    $region15: #{tpu_custom_call.1} parent=1 // pred_check_branch
      %262 = sbr.rel (%p260) target = $region17
    $region16: #{tpu_custom_call.1} parent=1 // pred_region
      %v263 = vld [vmem:[#allocation3] sm:$0x1]
      %264 = vst.msk [vmem:[#allocation7] sm:$0x1] %vm258, %v263
    $region17: #{tpu_custom_call.1} parent=1 // pred_fallthru
      _
    // Predicated region
    $region18: #{tpu_custom_call.1} parent=1 // pred_check
      _
    $region19: #{tpu_custom_call.1} parent=1 // pred_check_branch
      %266 = sbr.rel (0) target = $region21
    $region20: #{tpu_custom_call.1} parent=1 // pred_region
      %s268 = ssub.s32 16, 16
      %269 = vsyncadd [#allocation6], %s268
      %s271 = sshll.u32 [#allocation7], 4
      %s272 = int_to_ptr.vmem [resolvable:$true] %s271
      %274 = dma.vmem_to_hbm [thread:$0]  %s272, 16, %s1, [#allocation6]
    $region21: #{tpu_custom_call.1} parent=1 // pred_fallthru
      _
    // Predicated region
    $region22: #{tpu_custom_call.1} parent=1 // pred_check
      _
    $region23: #{tpu_custom_call.1} parent=1 // pred_check_branch
      %276 = sbr.rel (0) target = $region25
    $region24: #{tpu_custom_call.1} parent=1 // pred_region
      %277 = dma.done [#allocation6], 16
    $region25: #{tpu_custom_call.1} parent=1 // pred_fallthru
      _
    %278 = vsyncpa [#allocation5], 1
    %279 = vsyncpa [#allocation6], 1

</llo_original>
